<compile_context>
chip_gen: v6e
topology: v6e:2x2x1
jax: 0.10.0
libtpu: 0.0.40
codegen_flags: <defaults>
</compile_context>

<pallas_src>
import jax
import jax.numpy as jnp
from jax.experimental import pallas as pl
from jax.experimental.pallas import tpu as pltpu


def attention_self_kernel(x_ref, w1_ref, b1_ref, w2_ref, mask_ref,
                          attn_ref, ctx_ref):
    Bt, S, D = x_ref.shape
    H = w1_ref.shape[1]

    x = x_ref[...]                                    # (Bt, S, D), native dtype

    # ff1 + tanh: one large (Bt*S, D) @ (D, H) MXU matmul, f32 accumulation.
    h = jnp.tanh(
        jnp.dot(x.reshape(Bt * S, D), w1_ref[...],
                preferred_element_type=jnp.float32)
        + b1_ref[...]                                 # (1, H) broadcast, f32
    )                                                 # (Bt*S, H) f32
    h = h.reshape(Bt, S, H)                           # (Bt, S, H)

    # ff2 (H -> 1, no bias) on VPU + XLU: broadcast-multiply by the weight row
    # and lane-reduce over H.  Scores come out lane-major: (Bt, S), S in lanes.
    scores = jnp.sum(h * w2_ref[...], axis=-1)        # (Bt, S) f32

    # masked_fill(mask == 0, -1e9); mask is dense int32 (Bt, S).
    scores = jnp.where(mask_ref[...] == 0, jnp.float32(-1.0e9), scores)

    # softmax over the sequence dimension, fully lane-major.
    m = jnp.max(scores, axis=-1, keepdims=True)       # (Bt, 1)
    e = jnp.exp(scores - m)                           # (Bt, S)
    denom = jnp.sum(e, axis=-1, keepdims=True)        # (Bt, 1)
    attn = e * pl.reciprocal(denom, approx=True)      # (Bt, S)
    attn_ref[...] = attn.astype(attn_ref.dtype)

    # ctx_vec = attn @ x per sequence: batched (1, S) @ (S, D) on the MXU.
    ctx = jnp.einsum('bqs,bsd->bqd',
                     attn[:, None, :].astype(x.dtype), x,
                     preferred_element_type=jnp.float32)   # (Bt, 1, D)
    ctx_ref[...] = ctx[:, 0, :].astype(ctx_ref.dtype)


def _vmem_bytes(bt, S, D, H, itemsize):
    """Rough per-step VMEM estimate (double-buffered I/O + f32 intermediates)."""
    return (2 * bt * S * D * itemsize          # x tile (double-buffered)
            + 2 * bt * S * 4                   # int32 mask tile
            + 2 * bt * (S + D) * itemsize      # attn / ctx output tiles
            + 2 * bt * S * H * 4               # f32 h intermediate
            + 2 * (D * H + 2 * H) * 4)         # weights


def _pick_block_batch(B, S, D, H, itemsize):
    """Largest divisor Bt of B whose working set fits a conservative VMEM
    budget (sized so it is safe under v7x's smaller VMEM / 32 MiB scoped
    default).  Prefers >= 2 grid steps (megacore / dual TensorCore) when the
    per-step M = Bt*S stays large enough to be worth splitting."""
    budget = 20 * 1024 * 1024
    bt = 1
    for d in range(1, B + 1):
        if B % d:
            continue
        if _vmem_bytes(d, S, D, H, itemsize) > budget:
            break
        bt = d
        if d * S >= 2048:        # plenty of M rows per step; stop growing
            break
    if B // bt < 2:
        for d in range(bt - 1, 0, -1):
            if B % d == 0 and d * S >= 256:
                bt = d
                break
    return bt


def attention_self(x, w1, b1, w2, mask=None):
    """x: (B, S, D); w1: (D, H) (=ff1.weight^T); b1: (H,); w2: (H, 1)
    (=ff2.weight^T); mask: (B, S) or None.

    Returns (attn, ctx_vec) with shapes (B, S), (B, D) — matches the PyTorch
    AttentionSelf.forward (dropout_rate=None path)."""
    B, S, D = x.shape
    H = w1.shape[1]

    # Robust boolean mask as int32 (avoids bf16 ==0 misclassification).
    if mask is None:
        mask_i = jnp.ones((B, S), dtype=jnp.int32)
    else:
        mask_i = (mask != 0).astype(jnp.int32)

    b1_2d = b1.reshape(1, H).astype(jnp.float32)
    w2_row = w2.reshape(1, H).astype(jnp.float32)   # ff2 weight as lane-dense row

    itemsize = jnp.dtype(x.dtype).itemsize
    Bt = _pick_block_batch(B, S, D, H, itemsize)
    grid = (B // Bt,)

    need = _vmem_bytes(Bt, S, D, H, itemsize)
    vmem_limit = int(min(max(2 * need + (4 << 20), 16 << 20), 48 << 20))

    # Note: w1/b1/w2 index_maps are grid-invariant, so Pallas only fetches them
    # once; an explicit single-buffer hint is unnecessary at these sizes.
    attn, ctx = pl.pallas_call(
        attention_self_kernel,
        out_shape=(
            jax.ShapeDtypeStruct((B, S), x.dtype),
            jax.ShapeDtypeStruct((B, D), x.dtype),
        ),
        grid=grid,
        in_specs=[
            pl.BlockSpec((Bt, S, D), lambda b: (b, 0, 0)),   # x
            pl.BlockSpec((D, H), lambda b: (0, 0)),          # w1
            pl.BlockSpec((1, H), lambda b: (0, 0)),          # b1
            pl.BlockSpec((1, H), lambda b: (0, 0)),          # w2 (row)
            pl.BlockSpec((Bt, S), lambda b: (b, 0)),         # mask (lane-dense)
        ],
        out_specs=[
            pl.BlockSpec((Bt, S), lambda b: (b, 0)),         # attn (lane-dense)
            pl.BlockSpec((Bt, D), lambda b: (b, 0)),         # ctx
        ],
        compiler_params=pltpu.CompilerParams(
            dimension_semantics=("parallel",),
            vmem_limit_bytes=vmem_limit),
    )(x, w1, b1_2d, w2_row, mask_i)

    return attn, ctx


def attention_self_ref(x, w1, b1, w2, mask=None):
    """Pure-JAX reference mirroring the PyTorch forward."""
    h = jnp.tanh(x @ w1 + b1)                 # (B, S, H)
    scores = (h @ w2)[..., 0]                 # (B, S)
    if mask is not None:
        scores = jnp.where(mask == 0, -1.0e9, scores)
    attn = jax.nn.softmax(scores, axis=1)     # (B, S)
    ctx = jnp.einsum("bs,bsd->bd", attn, x)   # (B, D)
    return attn, ctx


if __name__ == "__main__":
    # TODO(synk): dropout_rate is None here; torch.nn.Dropout on attn weights
    # (training-mode stochastic masking) is not reproduced in the kernel.
    B, S, D, H = 2, 8, 32, 32

    key = jax.random.PRNGKey(0)
    kx, kw1, kb1, kw2, km = jax.random.split(key, 5)

    x = jax.random.normal(kx, (B, S, D), dtype=jnp.float32)
    # Deterministic synthetic params (PyTorch Linear-like uniform ranges).
    bound1 = 1.0 / jnp.sqrt(jnp.float32(D))
    w1 = jax.random.uniform(kw1, (D, H), minval=-bound1, maxval=bound1,
                            dtype=jnp.float32)   # ff1.weight^T
    b1 = jax.random.uniform(kb1, (H,), minval=-bound1, maxval=bound1,
                            dtype=jnp.float32)   # ff1.bias
    bound2 = 1.0 / jnp.sqrt(jnp.float32(H))
    w2 = jax.random.uniform(kw2, (H, 1), minval=-bound2, maxval=bound2,
                            dtype=jnp.float32)   # ff2.weight^T (no bias)

    # A mask with a few zeros to exercise the masked_fill path.
    mask = (jax.random.uniform(km, (B, S)) > 0.2).astype(jnp.float32)

    attn, ctx = attention_self(x, w1, b1, w2, mask)
    jax.block_until_ready((attn, ctx))

    attn_ref, ctx_ref = attention_self_ref(x, w1, b1, w2, mask)
    assert attn.shape == (B, S) and ctx.shape == (B, D)
    # Tolerances account for the EUP approx-reciprocal in the softmax
    # normalization (relative error ~2e-4).
    assert jnp.allclose(attn, attn_ref, atol=2e-3, rtol=2e-3)
    assert jnp.allclose(ctx, ctx_ref, atol=2e-3, rtol=2e-3)

    print("KERNEL_OK")
</pallas_src>

<mosaic_0001>
module attributes {stable_mosaic.version = 11 : i64} {
  func.func @attention_self_kernel(%arg0: i32, %arg1: memref<2x8x32xf32, #tpu.memory_space<vmem>>, %arg2: memref<32x32xf32, #tpu.memory_space<vmem>>, %arg3: memref<1x32xf32, #tpu.memory_space<vmem>>, %arg4: memref<1x32xf32, #tpu.memory_space<vmem>>, %arg5: memref<2x8xi32, #tpu.memory_space<vmem>>, %arg6: memref<2x8xf32, #tpu.memory_space<vmem>>, %arg7: memref<2x32xf32, #tpu.memory_space<vmem>>) attributes {dimension_semantics = [#tpu.dimension_semantics<parallel>], iteration_bounds = array<i64: 1>, scalar_prefetch = 0 : i64, scratch_operands = 0 : i64, tpu.core_type = #tpu.core_type<tc>, window_params = [{transform_indices = @transform_0, window_bounds = array<i64: 2, 8, 32>}, {pipeline_mode = #tpu.pipeline_mode<synchronous>, transform_indices = @transform_1, window_bounds = array<i64: 32, 32>}, {pipeline_mode = #tpu.pipeline_mode<synchronous>, transform_indices = @transform_2, window_bounds = array<i64: 1, 32>}, {pipeline_mode = #tpu.pipeline_mode<synchronous>, transform_indices = @transform_3, window_bounds = array<i64: 1, 32>}, {transform_indices = @transform_4, window_bounds = array<i64: 2, 8>}, {transform_indices = @transform_5, window_bounds = array<i64: 2, 8>}, {transform_indices = @transform_6, window_bounds = array<i64: 2, 32>}]} {
    %c0 = arith.constant 0 : index
    %c0_0 = arith.constant 0 : index
    %c0_1 = arith.constant 0 : index
    %0 = vector.load %arg1[%c0, %c0_0, %c0_1] : memref<2x8x32xf32, #tpu.memory_space<vmem>>, vector<2x8x32xf32>
    %1 = vector.shape_cast %0 : vector<2x8x32xf32> to vector<16x32xf32>
    %c0_2 = arith.constant 0 : index
    %c0_3 = arith.constant 0 : index
    %2 = vector.load %arg2[%c0_2, %c0_3] : memref<32x32xf32, #tpu.memory_space<vmem>>, vector<32x32xf32>
    %cst = arith.constant dense<0.000000e+00> : vector<16x32xf32>
    %3 = tpu.matmul %1, %2, %cst {dimension_numbers = #tpu.dot_dimension_numbers<[1], [0], [0], [1], [0, 0, 1, 1], [], []>} : vector<16x32xf32>, vector<32x32xf32>, vector<16x32xf32> -> vector<16x32xf32>
    %c0_4 = arith.constant 0 : index
    %c0_5 = arith.constant 0 : index
    %4 = vector.load %arg3[%c0_4, %c0_5] : memref<1x32xf32, #tpu.memory_space<vmem>>, vector<1x32xf32>
    %5 = vector.broadcast %4 : vector<1x32xf32> to vector<16x32xf32>
    %6 = arith.addf %3, %5 : vector<16x32xf32>
    %7 = math.tanh %6 : vector<16x32xf32>
    %8 = vector.shape_cast %7 : vector<16x32xf32> to vector<2x8x32xf32>
    %c0_6 = arith.constant 0 : index
    %c0_7 = arith.constant 0 : index
    %9 = vector.load %arg4[%c0_6, %c0_7] : memref<1x32xf32, #tpu.memory_space<vmem>>, vector<1x32xf32>
    %10 = vector.shape_cast %9 : vector<1x32xf32> to vector<1x1x32xf32>
    %11 = vector.broadcast %10 : vector<1x1x32xf32> to vector<2x8x32xf32>
    %12 = arith.mulf %8, %11 : vector<2x8x32xf32>
    %cst_8 = arith.constant dense<0.000000e+00> : vector<2x8xf32>
    %13 = vector.multi_reduction <add>, %12, %cst_8 [2] : vector<2x8x32xf32> to vector<2x8xf32>
    %c0_9 = arith.constant 0 : index
    %c0_10 = arith.constant 0 : index
    %14 = vector.load %arg5[%c0_9, %c0_10] : memref<2x8xi32, #tpu.memory_space<vmem>>, vector<2x8xi32>
    %c0_i32 = arith.constant 0 : i32
    %15 = vector.broadcast %c0_i32 : i32 to vector<2x8xi32>
    %16 = arith.cmpi eq, %14, %15 : vector<2x8xi32>
    %cst_11 = arith.constant -1.000000e+09 : f32
    %17 = vector.broadcast %cst_11 : f32 to vector<2x8xf32>
    %18 = arith.select %16, %17, %13 : vector<2x8xi1>, vector<2x8xf32>
    %cst_12 = arith.constant dense<0xFF800000> : vector<2xf32>
    %19 = vector.multi_reduction <maximumf>, %18, %cst_12 [1] : vector<2x8xf32> to vector<2xf32>
    %20 = vector.shape_cast %19 : vector<2xf32> to vector<2x1xf32>
    %21 = vector.broadcast %20 : vector<2x1xf32> to vector<2x8xf32>
    %22 = arith.subf %18, %21 : vector<2x8xf32>
    %23 = math.exp %22 : vector<2x8xf32>
    %cst_13 = arith.constant dense<0.000000e+00> : vector<2xf32>
    %24 = vector.multi_reduction <add>, %23, %cst_13 [1] : vector<2x8xf32> to vector<2xf32>
    %25 = vector.shape_cast %24 : vector<2xf32> to vector<2x1xf32>
    %26 = tpu.reciprocal %25 {approx = true} : vector<2x1xf32> -> vector<2x1xf32>
    %27 = vector.broadcast %26 : vector<2x1xf32> to vector<2x8xf32>
    %28 = arith.mulf %23, %27 : vector<2x8xf32>
    %c0_14 = arith.constant 0 : index
    %c0_15 = arith.constant 0 : index
    %29 = vector.load %arg6[%c0_14, %c0_15] : memref<2x8xf32, #tpu.memory_space<vmem>>, vector<2x8xf32>
    tpu.vector_store %arg6[%c0_14, %c0_15], %28 {strides = array<i32>} : memref<2x8xf32, #tpu.memory_space<vmem>>, vector<2x8xf32>,
    %30 = vector.shape_cast %28 : vector<2x8xf32> to vector<2x1x8xf32>
    "tpu.trace_start"() <{level = 10 : i32, message = "bqs,bsd->bqd"}> : () -> ()
    %cst_16 = arith.constant dense<0.000000e+00> : vector<2x1x32xf32>
    %31 = tpu.matmul %30, %0, %cst_16 {dimension_numbers = #tpu.dot_dimension_numbers<[2], [1], [1], [2], [0, 0, 0, 1, 1, 2], [0], [0]>} : vector<2x1x8xf32>, vector<2x8x32xf32>, vector<2x1x32xf32> -> vector<2x1x32xf32>
    "tpu.trace_stop"() : () -> ()
    %32 = vector.shape_cast %31 : vector<2x1x32xf32> to vector<2x32xf32>
    %c0_17 = arith.constant 0 : index
    %c0_18 = arith.constant 0 : index
    %33 = vector.load %arg7[%c0_17, %c0_18] : memref<2x32xf32, #tpu.memory_space<vmem>>, vector<2x32xf32>
    tpu.vector_store %arg7[%c0_17, %c0_18], %32 {strides = array<i32>} : memref<2x32xf32, #tpu.memory_space<vmem>>, vector<2x32xf32>,
    return
  }
  func.func @transform_0(%arg0: i32) -> (i32, i32, i32) {
    %c0_i32 = arith.constant 0 : i32
    %c0_i32_0 = arith.constant 0 : i32
    %c0_i32_1 = arith.constant 0 : i32
    return %arg0, %c0_i32, %c0_i32_0 : i32, i32, i32
  }
  func.func @transform_1(%arg0: i32) -> (i32, i32) {
    %c0_i32 = arith.constant 0 : i32
    %c0_i32_0 = arith.constant 0 : i32
    %c0_i32_1 = arith.constant 0 : i32
    return %c0_i32, %c0_i32_0 : i32, i32
  }
  func.func @transform_2(%arg0: i32) -> (i32, i32) {
    %c0_i32 = arith.constant 0 : i32
    %c0_i32_0 = arith.constant 0 : i32
    %c0_i32_1 = arith.constant 0 : i32
    return %c0_i32, %c0_i32_0 : i32, i32
  }
  func.func @transform_3(%arg0: i32) -> (i32, i32) {
    %c0_i32 = arith.constant 0 : i32
    %c0_i32_0 = arith.constant 0 : i32
    %c0_i32_1 = arith.constant 0 : i32
    return %c0_i32, %c0_i32_0 : i32, i32
  }
  func.func @transform_4(%arg0: i32) -> (i32, i32) {
    %c0_i32 = arith.constant 0 : i32
    %c0_i32_0 = arith.constant 0 : i32
    return %arg0, %c0_i32 : i32, i32
  }
  func.func @transform_5(%arg0: i32) -> (i32, i32) {
    %c0_i32 = arith.constant 0 : i32
    %c0_i32_0 = arith.constant 0 : i32
    return %arg0, %c0_i32 : i32, i32
  }
  func.func @transform_6(%arg0: i32) -> (i32, i32) {
    %c0_i32 = arith.constant 0 : i32
    %c0_i32_0 = arith.constant 0 : i32
    return %arg0, %c0_i32 : i32, i32
  }
}

</mosaic_0001>

<llo_original>
// kernel: tpu_custom_call.1
$region0: #{tpu_custom_call.1}
  #allocation0 [shape = 'u32[]', space=smem, size = 0x4, offset = 0x4, fixed_abs, tag = 'smem constant byte address 0x4 - core index']
  #allocation1 [shape = 'u32[144,128]{1,0:T(1,128)}', space=vmem, size = 0x12000, scoped, tag = 'internal scratch']
  %s0 = inlined_call_operand.hbm [shape: f32[2,8,32], index: 0, kind: input, shape index: {}]
  %s1 = inlined_call_operand.hbm [shape: f32[32,32], index: 1, kind: input, shape index: {}]
  %s2 = inlined_call_operand.vmem [shape: f32[1,32], index: 2, kind: input, shape index: {}]
  %s3 = inlined_call_operand.vmem [shape: f32[1,32], index: 3, kind: input, shape index: {}]
  %s4 = inlined_call_operand.vmem [shape: s32[2,8], index: 4, kind: input, shape index: {}]
  %s5 = inlined_call_operand.hbm [shape: f32[2,8], index: 5, kind: output, shape index: {0}]
  %s6 = inlined_call_operand.hbm [shape: f32[2,32], index: 6, kind: output, shape index: {1}]
  %7 = xla_tuple %s5, %s6
  %s8 = sld [smem:[#allocation0]]
  $region46: #{tpu_custom_call.1} parent=0
    _
  %s10 = ssub.s32 1, %s8
  %s11 = scalar_select 0, %s10, %s8
  $region1: #{tpu_custom_call.1} parent=0
    #allocation2 [shape = 'u8[8192]{0}', space=vmem, size = 0x2000, scoped, tag = 'input window, operand 0, single buffered']
    #allocation3 [shape = 's32[1]{0}', space=sflag, size = 0x4, scoped, tag = 'scoped memory for tpu_custom_call.1']
    #allocation4 [shape = 's32[1]{0}', space=sflag, size = 0x4, scoped, tag = 'scoped memory for tpu_custom_call.1']
    #allocation5 [shape = 'u8[16384]{0}', space=vmem, size = 0x4000, scoped, tag = 'input window, operand 1, single buffered']
    #allocation6 [shape = 's32[1]{0}', space=sflag, size = 0x4, scoped, tag = 'scoped memory for tpu_custom_call.1']
    #allocation7 [shape = 'u8[1024]{0}', space=vmem, size = 0x400, scoped, tag = 'output window, operand 0, single buffered']
    #allocation8 [shape = 'u8[1024]{0}', space=vmem, size = 0x400, scoped, tag = 'output window, operand 1, single buffered']
    #allocation9 [shape = 's32[1]{0}', space=sflag, size = 0x4, scoped, tag = 'scoped memory for tpu_custom_call.1']
    %12 = vsyncpa [#allocation3], 0
    %13 = vsyncpa [#allocation6], 0
    %14 = vsyncpa [#allocation4], 0
    %15 = vsyncpa [#allocation9], 0
    // Predicated region
    $region2: #{tpu_custom_call.1} parent=1 // pred_check
      _
    $region3: #{tpu_custom_call.1} parent=1 // pred_check_branch
      %17 = sbr.rel (0) target = $region5
    $region4: #{tpu_custom_call.1} parent=1 // pred_region
      %s19 = ssub.s32 256, 256
      %20 = vsyncadd [#allocation3], %s19
      %s21 = sshll.u32 [#allocation2], 4
      %s22 = int_to_ptr.vmem [resolvable:$true] %s21
      %27 = dma.hbm_to_vmem [thread:$0]  %s0, 256, %s22, [#allocation3], 128, 128, 8
    $region5: #{tpu_custom_call.1} parent=1 // pred_fallthru
      _
    // Predicated region
    $region6: #{tpu_custom_call.1} parent=1 // pred_check
      _
    $region7: #{tpu_custom_call.1} parent=1 // pred_check_branch
      %29 = sbr.rel (0) target = $region9
    $region8: #{tpu_custom_call.1} parent=1 // pred_region
      %s31 = ssub.s32 512, 512
      %32 = vsyncadd [#allocation6], %s31
      %s33 = sshll.u32 [#allocation5], 4
      %s34 = int_to_ptr.vmem [resolvable:$true] %s33
      %39 = dma.hbm_to_vmem [thread:$0]  %s1, 512, %s34, [#allocation6], 128, 128, 8
    $region9: #{tpu_custom_call.1} parent=1 // pred_fallthru
      _
    // Predicated region
    $region10: #{tpu_custom_call.1} parent=1 // pred_check
      _
    $region11: #{tpu_custom_call.1} parent=1 // pred_check_branch
      %41 = sbr.rel (0) target = $region13
    $region12: #{tpu_custom_call.1} parent=1 // pred_region
      _
    $region13: #{tpu_custom_call.1} parent=1 // pred_fallthru
      _
    // Predicated region
    $region14: #{tpu_custom_call.1} parent=1 // pred_check
      _
    $region15: #{tpu_custom_call.1} parent=1 // pred_check_branch
      %43 = sbr.rel (0) target = $region17
    $region16: #{tpu_custom_call.1} parent=1 // pred_region
      _
    $region17: #{tpu_custom_call.1} parent=1 // pred_fallthru
      _
    // Predicated region
    $region18: #{tpu_custom_call.1} parent=1 // pred_check
      _
    $region19: #{tpu_custom_call.1} parent=1 // pred_check_branch
      %45 = sbr.rel (0) target = $region21
    $region20: #{tpu_custom_call.1} parent=1 // pred_region
      _
    $region21: #{tpu_custom_call.1} parent=1 // pred_fallthru
      _
    // Predicated region
    $region22: #{tpu_custom_call.1} parent=1 // pred_check
      _
    $region23: #{tpu_custom_call.1} parent=1 // pred_check_branch
      %47 = sbr.rel (0) target = $region25
    $region24: #{tpu_custom_call.1} parent=1 // pred_region
      %48 = dma.done [#allocation3], 256
    $region25: #{tpu_custom_call.1} parent=1 // pred_fallthru
      _
    // Predicated region
    $region26: #{tpu_custom_call.1} parent=1 // pred_check
      _
    $region27: #{tpu_custom_call.1} parent=1 // pred_check_branch
      %50 = sbr.rel (0) target = $region29
    $region28: #{tpu_custom_call.1} parent=1 // pred_region
      %51 = dma.done [#allocation6], 512
    $region29: #{tpu_custom_call.1} parent=1 // pred_fallthru
      _
    %v52 = vld [vmem:[#allocation2] sm:$0xff]
    %v53 = vld [vmem:[#allocation2 + $0x8] sm:$0xff]
    %v54 = vld [vmem:[#allocation5] sm:$0xff]
    %v55 = vld [vmem:[#allocation5 + $0x8] sm:$0xff]
    %v56 = vld [vmem:[#allocation5 + $0x10] sm:$0xff]
    %v57 = vld [vmem:[#allocation5 + $0x18] sm:$0xff]
    %v58 = vld [vmem:[%s2] sm:$0x1]
    %v60 = vlaneseq
    %v61 = vshrl.u32 %v60, 7
    %v62 = vsub.s32 0, %v61
    %v63 = vrot.slane %v58, %v62
    %vm65 = vcmask 261120
    %v67 = vsel %vm65, %v52, 0
    %v70 = vsel %vm65, %v53, 0
    %72 = vmatprep.subr.mxu0 0.0
    %73 = vmatpush1.msra.mxu0 0.0
    %74 = vmatprep.subr.mxu0 0.0
    %75 = vmatpush1.msra.mxu0 0.0
    %76 = vmatprep.subr.mxu0 0.0
    %77 = vmatpush1.msra.mxu0 0.0
    %78 = vmatprep.subr.mxu0 0.0
    %79 = vmatpush1.msra.mxu0 0.0
    %80 = vmatprep.subr.mxu0 0.0
    %81 = vmatpush1.msra.mxu0 0.0
    %82 = vmatprep.subr.mxu0 0.0
    %83 = vmatpush1.msra.mxu0 0.0
    %84 = vmatprep.subr.mxu0 0.0
    %85 = vmatpush1.msra.mxu0 0.0
    %86 = vmatprep.subr.mxu0 0.0
    %87 = vmatpush1.msra.mxu0 0.0
    %88 = vmatprep.subr.mxu0 0.0
    %89 = vmatpush1.msra.mxu0 0.0
    %90 = vmatprep.subr.mxu0 0.0
    %91 = vmatpush1.msra.mxu0 0.0
    %92 = vmatprep.subr.mxu0 0.0
    %93 = vmatpush1.msra.mxu0 0.0
    %94 = vmatprep.subr.mxu0 0.0
    %95 = vmatpush1.msra.mxu0 0.0
    %96 = vmatprep.subr.mxu0 0.0
    %97 = vmatpush1.msra.mxu0 %v57
    %98 = vmatprep.subr.mxu0 0.0
    %99 = vmatpush1.msra.mxu0 %v56
    %100 = vmatprep.subr.mxu0 0.0
    %101 = vmatpush1.msra.mxu0 %v55
    %102 = vmatprep.subr.mxu0 0.0
    %103 = vmatpush1.msra.mxu0 %v54
    %104 = vmatprep.subr.mxu0 0.0
    %105 = vmatpush2.msra.mxu0 0.0
    %106 = vmatprep.subr.mxu0 0.0
    %107 = vmatpush2.msra.mxu0 0.0
    %108 = vmatprep.subr.mxu0 0.0
    %109 = vmatpush2.msra.mxu0 0.0
    %110 = vmatprep.subr.mxu0 0.0
    %111 = vmatpush2.msra.mxu0 0.0
    %112 = vmatprep.subr.mxu0 0.0
    %113 = vmatpush2.msra.mxu0 0.0
    %114 = vmatprep.subr.mxu0 0.0
    %115 = vmatpush2.msra.mxu0 0.0
    %116 = vmatprep.subr.mxu0 0.0
    %117 = vmatpush2.msra.mxu0 0.0
    %118 = vmatprep.subr.mxu0 0.0
    %119 = vmatpush2.msra.mxu0 0.0
    %120 = vmatprep.subr.mxu0 0.0
    %121 = vmatpush2.msra.mxu0 0.0
    %122 = vmatprep.subr.mxu0 0.0
    %123 = vmatpush2.msra.mxu0 0.0
    %124 = vmatprep.subr.mxu0 0.0
    %125 = vmatpush2.msra.mxu0 0.0
    %126 = vmatprep.subr.mxu0 0.0
    %127 = vmatpush2.msra.mxu0 0.0
    %128 = vmatprep.subr.mxu0 0.0
    %129 = vmatpush2.msra.mxu0 0.0
    %130 = vmatprep.subr.mxu0 0.0
    %131 = vmatpush2.msra.mxu0 0.0
    %132 = vmatprep.subr.mxu0 0.0
    %133 = vmatpush2.msra.mxu0 0.0
    %134 = vmatprep.subr.mxu0 0.0
    %135 = vmatpush2.msra.mxu0 0.0
    %136 = vmatprep.mubr.f32.mxu0 0.0
    %137 = vmatmul.mubr.f32.gmra.mxu0 %v67
    %v138 = vpop.f32.mrf.mxu0
    %v139 = vadd.f32 %v63, %v138
    %v140 = vpop.f32.mrf.mxu0
    %141 = vmatprep.mubr.f32.mxu0 0.0
    %142 = vmatmul.mubr.f32.gmra.mxu0 %v70
    %v143 = vpop.f32.mrf.mxu0
    %v144 = vadd.f32 %v63, %v143
    %v145 = vpop.f32.mrf.mxu0
    %146 = vdwg.mxu0
    %v147 = vtanh.pop %v139
    %v148 = vtanh.pop %v144
    %v149 = vld [vmem:[%s3] sm:$0x1]
    %v151 = vlaneseq
    %v152 = vshrl.u32 %v151, 7
    %v153 = vsub.s32 0, %v152
    %v154 = vrot.slane %v149, %v153
    %v156 = vmul.f32 %v147, %v154
    %v157 = vmul.f32 %v148, %v154
    %v158 = vsel %vm65, %v156, 0.0
    %159 = vadd.xlane.f32.xlu0 %v158
    %v160 = vpop.xlane.xlu0 %159
    %v161 = vsel %vm65, %v157, 0.0
    %162 = vadd.xlane.f32.xlu0 %v161
    %v163 = vpop.xlane.xlu0 %162
    %v164 = vld [vmem:[%s4] sm:$0x3]
    %vm165 = vcmp.eq.s32.totalorder %v164, 0
    %v168 = vlaneseq
    %v169 = vand.u32 %v168, 127
    %v170 = vlaneseq
    %v171 = vshrl.u32 %v170, 7
    %v172 = vsub.s32 %v169, %v171
    %v173 = vrot.slane %v160, %v172
    %v174 = vlaneseq
    %v175 = vshrl.u32 %v174, 7
    %v176 = vsub.s32 %v169, %v175
    %v177 = vrot.slane %v163, %v176
    %vm178 = vcmask 1041409
    %v179 = vsel %vm178, %v177, %v173
    %v181 = vsel %vm165, -1e+09, %v179
    %vm182 = vcmask 58368
    %v183 = vsel %vm182, %v181, -inf
    %184 = vmax.xlane.f32.xlu0 %v183
    %v185 = vpop.xlane.xlu0 %184
    %v186 = vsub.f32 %v181, %v185
    %v187 = vmul.f32 %v186, 1.442695
    %v188 = vpow.pop %v187
    %v189 = vsel %vm182, %v188, 0.0
    %190 = vadd.xlane.f32.xlu0 %v189
    %v191 = vpop.xlane.xlu0 %190
    %v192 = vrcp.pop %v191
    %v193 = vmul.f32 %v188, %v192
    %194 = vst.msk [vmem:[#allocation7] sm:$0x3] %vm182, %v193
    %v197 = vunpack.c.l.s4 1966171168
    %v198 = vunpack.c.0.s8 %v197
    %v199 = vlaneseq
    %v200 = vshrl.u32 %v199, 7
    %v201 = vsub.s32 %v198, %v200
    %v202 = vrot.slane %v193, %v201
    %v203 = vcombine.high %v202, %v202
    %v205 = vunpack.c.l.s4 1966171168
    %v206 = vunpack.c.0.s8 %v205
    %v207 = vlaneseq
    %v208 = vshrl.u32 %v207, 7
    %v209 = vsub.s32 %v206, %v208
    %v210 = vrot.slane %v202, %v209
    %v212 = vunpack.c.l.s4 1966171168
    %v213 = vunpack.c.0.s8 %v212
    %v214 = vlaneseq
    %v215 = vshrl.u32 %v214, 7
    %v216 = vsub.s32 %v213, %v215
    %v217 = vrot.slane %v203, %v216
    %vm218 = vcmask 64512
    %v219 = vsel %vm218, %v210, 0
    %221 = vmatprep.subr.mxu0 0.0
    %222 = vmatpush1.msra.mxu0 0.0
    %223 = vmatprep.subr.mxu0 0.0
    %224 = vmatpush1.msra.mxu0 0.0
    %225 = vmatprep.subr.mxu0 0.0
    %226 = vmatpush1.msra.mxu0 0.0
    %227 = vmatprep.subr.mxu0 0.0
    %228 = vmatpush1.msra.mxu0 0.0
    %229 = vmatprep.subr.mxu0 0.0
    %230 = vmatpush1.msra.mxu0 0.0
    %231 = vmatprep.subr.mxu0 0.0
    %232 = vmatpush1.msra.mxu0 0.0
    %233 = vmatprep.subr.mxu0 0.0
    %234 = vmatpush1.msra.mxu0 0.0
    %235 = vmatprep.subr.mxu0 0.0
    %236 = vmatpush1.msra.mxu0 0.0
    %237 = vmatprep.subr.mxu0 0.0
    %238 = vmatpush1.msra.mxu0 0.0
    %239 = vmatprep.subr.mxu0 0.0
    %240 = vmatpush1.msra.mxu0 0.0
    %241 = vmatprep.subr.mxu0 0.0
    %242 = vmatpush1.msra.mxu0 0.0
    %243 = vmatprep.subr.mxu0 0.0
    %244 = vmatpush1.msra.mxu0 0.0
    %245 = vmatprep.subr.mxu0 0.0
    %246 = vmatpush1.msra.mxu0 0.0
    %247 = vmatprep.subr.mxu0 0.0
    %248 = vmatpush1.msra.mxu0 0.0
    %249 = vmatprep.subr.mxu0 0.0
    %250 = vmatpush1.msra.mxu0 0.0
    %251 = vmatprep.subr.mxu0 0.0
    %252 = vmatpush1.msra.mxu0 %v52
    %253 = vmatprep.subr.mxu0 0.0
    %254 = vmatpush2.msra.mxu0 0.0
    %255 = vmatprep.subr.mxu0 0.0
    %256 = vmatpush2.msra.mxu0 0.0
    %257 = vmatprep.subr.mxu0 0.0
    %258 = vmatpush2.msra.mxu0 0.0
    %259 = vmatprep.subr.mxu0 0.0
    %260 = vmatpush2.msra.mxu0 0.0
    %261 = vmatprep.subr.mxu0 0.0
    %262 = vmatpush2.msra.mxu0 0.0
    %263 = vmatprep.subr.mxu0 0.0
    %264 = vmatpush2.msra.mxu0 0.0
    %265 = vmatprep.subr.mxu0 0.0
    %266 = vmatpush2.msra.mxu0 0.0
    %267 = vmatprep.subr.mxu0 0.0
    %268 = vmatpush2.msra.mxu0 0.0
    %269 = vmatprep.subr.mxu0 0.0
    %270 = vmatpush2.msra.mxu0 0.0
    %271 = vmatprep.subr.mxu0 0.0
    %272 = vmatpush2.msra.mxu0 0.0
    %273 = vmatprep.subr.mxu0 0.0
    %274 = vmatpush2.msra.mxu0 0.0
    %275 = vmatprep.subr.mxu0 0.0
    %276 = vmatpush2.msra.mxu0 0.0
    %277 = vmatprep.subr.mxu0 0.0
    %278 = vmatpush2.msra.mxu0 0.0
    %279 = vmatprep.subr.mxu0 0.0
    %280 = vmatpush2.msra.mxu0 0.0
    %281 = vmatprep.subr.mxu0 0.0
    %282 = vmatpush2.msra.mxu0 0.0
    %283 = vmatprep.subr.mxu0 0.0
    %284 = vmatpush2.msra.mxu0 0.0
    %285 = vmatprep.mubr.f32.mxu0 0.0
    %286 = vmatmul.mubr.f32.gmra.mxu0 %v219
    %v287 = vpop.f32.mrf.mxu0
    %v288 = vadd.f32 0.0, %v287
    %v289 = vpop.f32.mrf.mxu0
    %290 = vdwg.mxu0
    %v291 = vsel %vm218, %v217, 0
    %293 = vmatprep.subr.mxu0 0.0
    %294 = vmatpush1.msra.mxu0 0.0
    %295 = vmatprep.subr.mxu0 0.0
    %296 = vmatpush1.msra.mxu0 0.0
    %297 = vmatprep.subr.mxu0 0.0
    %298 = vmatpush1.msra.mxu0 0.0
    %299 = vmatprep.subr.mxu0 0.0
    %300 = vmatpush1.msra.mxu0 0.0
    %301 = vmatprep.subr.mxu0 0.0
    %302 = vmatpush1.msra.mxu0 0.0
    %303 = vmatprep.subr.mxu0 0.0
    %304 = vmatpush1.msra.mxu0 0.0
    %305 = vmatprep.subr.mxu0 0.0
    %306 = vmatpush1.msra.mxu0 0.0
    %307 = vmatprep.subr.mxu0 0.0
    %308 = vmatpush1.msra.mxu0 0.0
    %309 = vmatprep.subr.mxu0 0.0
    %310 = vmatpush1.msra.mxu0 0.0
    %311 = vmatprep.subr.mxu0 0.0
    %312 = vmatpush1.msra.mxu0 0.0
    %313 = vmatprep.subr.mxu0 0.0
    %314 = vmatpush1.msra.mxu0 0.0
    %315 = vmatprep.subr.mxu0 0.0
    %316 = vmatpush1.msra.mxu0 0.0
    %317 = vmatprep.subr.mxu0 0.0
    %318 = vmatpush1.msra.mxu0 0.0
    %319 = vmatprep.subr.mxu0 0.0
    %320 = vmatpush1.msra.mxu0 0.0
    %321 = vmatprep.subr.mxu0 0.0
    %322 = vmatpush1.msra.mxu0 0.0
    %323 = vmatprep.subr.mxu0 0.0
    %324 = vmatpush1.msra.mxu0 %v53
    %325 = vmatprep.subr.mxu0 0.0
    %326 = vmatpush2.msra.mxu0 0.0
    %327 = vmatprep.subr.mxu0 0.0
    %328 = vmatpush2.msra.mxu0 0.0
    %329 = vmatprep.subr.mxu0 0.0
    %330 = vmatpush2.msra.mxu0 0.0
    %331 = vmatprep.subr.mxu0 0.0
    %332 = vmatpush2.msra.mxu0 0.0
    %333 = vmatprep.subr.mxu0 0.0
    %334 = vmatpush2.msra.mxu0 0.0
    %335 = vmatprep.subr.mxu0 0.0
    %336 = vmatpush2.msra.mxu0 0.0
    %337 = vmatprep.subr.mxu0 0.0
    %338 = vmatpush2.msra.mxu0 0.0
    %339 = vmatprep.subr.mxu0 0.0
    %340 = vmatpush2.msra.mxu0 0.0
    %341 = vmatprep.subr.mxu0 0.0
    %342 = vmatpush2.msra.mxu0 0.0
    %343 = vmatprep.subr.mxu0 0.0
    %344 = vmatpush2.msra.mxu0 0.0
    %345 = vmatprep.subr.mxu0 0.0
    %346 = vmatpush2.msra.mxu0 0.0
    %347 = vmatprep.subr.mxu0 0.0
    %348 = vmatpush2.msra.mxu0 0.0
    %349 = vmatprep.subr.mxu0 0.0
    %350 = vmatpush2.msra.mxu0 0.0
    %351 = vmatprep.subr.mxu0 0.0
    %352 = vmatpush2.msra.mxu0 0.0
    %353 = vmatprep.subr.mxu0 0.0
    %354 = vmatpush2.msra.mxu0 0.0
    %355 = vmatprep.subr.mxu0 0.0
    %356 = vmatpush2.msra.mxu0 0.0
    %357 = vmatprep.mubr.f32.mxu0 0.0
    %358 = vmatmul.mubr.f32.gmra.mxu0 %v291
    %v359 = vpop.f32.mrf.mxu0
    %v360 = vadd.f32 0.0, %v359
    %v361 = vpop.f32.mrf.mxu0
    %362 = vdwg.mxu0
    %v365 = vrot.slane %v360, 7
    %v366 = vsel %vm178, %v365, %v288
    %vm368 = vcmask 254976
    %369 = vst.msk [vmem:[#allocation8] sm:$0x3] %vm368, %v366
    // Predicated region
    $region30: #{tpu_custom_call.1} parent=1 // pred_check
      _
    $region31: #{tpu_custom_call.1} parent=1 // pred_check_branch
      %371 = sbr.rel (0) target = $region33
    $region32: #{tpu_custom_call.1} parent=1 // pred_region
      %s373 = ssub.s32 32, 32
      %374 = vsyncadd [#allocation4], %s373
      %s376 = sshll.u32 [#allocation7], 4
      %s377 = int_to_ptr.vmem [resolvable:$true] %s376
      %379 = dma.vmem_to_hbm [thread:$0]  %s377, 32, %s5, [#allocation4]
    $region33: #{tpu_custom_call.1} parent=1 // pred_fallthru
      _
    // Predicated region
    $region34: #{tpu_custom_call.1} parent=1 // pred_check
      _
    $region35: #{tpu_custom_call.1} parent=1 // pred_check_branch
      %381 = sbr.rel (0) target = $region37
    $region36: #{tpu_custom_call.1} parent=1 // pred_region
      %s383 = ssub.s32 32, 32
      %384 = vsyncadd [#allocation9], %s383
      %s386 = sshll.u32 [#allocation8], 4
      %s387 = int_to_ptr.vmem [resolvable:$true] %s386
      %389 = dma.vmem_to_hbm [thread:$0]  %s387, 32, %s6, [#allocation9]
    $region37: #{tpu_custom_call.1} parent=1 // pred_fallthru
      _
    // Predicated region
    $region38: #{tpu_custom_call.1} parent=1 // pred_check
      _
    $region39: #{tpu_custom_call.1} parent=1 // pred_check_branch
      %391 = sbr.rel (0) target = $region41
    $region40: #{tpu_custom_call.1} parent=1 // pred_region
      %392 = dma.done [#allocation4], 32
    $region41: #{tpu_custom_call.1} parent=1 // pred_fallthru
      _
    // Predicated region
    $region42: #{tpu_custom_call.1} parent=1 // pred_check
      _
    $region43: #{tpu_custom_call.1} parent=1 // pred_check_branch
      %394 = sbr.rel (0) target = $region45
    $region44: #{tpu_custom_call.1} parent=1 // pred_region
      %395 = dma.done [#allocation9], 32
    $region45: #{tpu_custom_call.1} parent=1 // pred_fallthru
      _
    %396 = vsyncpa [#allocation3], 1
    %397 = vsyncpa [#allocation6], 1
    %398 = vsyncpa [#allocation4], 1
    %399 = vsyncpa [#allocation9], 1

</llo_original>
